<compile_context>
chip_gen: v7x
topology: tpu7x:2x2x1
jax: 0.10.0
libtpu: 0.0.40
codegen_flags: <defaults>
</compile_context>

<pallas_src>
import jax
import jax.numpy as jnp
from jax.experimental import pallas as pl
from jax.experimental.pallas import tpu as pltpu


_VMEM_LIMIT_BYTES = 32 << 20   # explicit scoped-VMEM request; safe on v5e/v6e/v7x
_VMEM_TILE_BUDGET = 20 << 20   # keep the per-step working set well under the limit


def _round_up(x, m):
    return ((x + m - 1) // m) * m


def _round_down(x, m):
    return (x // m) * m


# ----------------------------- Pallas kernel -------------------------------
def _matmul_bias_kernel(p_ref, w_ref, b_ref, o_ref):
    # p_ref: (tm, K) bf16 im2col patch tile (K = C_in*kh*kw, full-extent block)
    # w_ref: (K, N)  bf16 flattened conv weight (resident across all tiles)
    # b_ref: (1, N)  f32 bias (resident)
    # o_ref: (tm, N) output tile; f32 accumulate + bias, cast on the store
    acc = jnp.dot(p_ref[...], w_ref[...], preferred_element_type=jnp.float32)
    o_ref[...] = (acc + b_ref[...]).astype(o_ref.dtype)


def _choose_tile_m(M, K, N, out_itemsize):
    """Pick the M tile size.

    Preferences:
      * a divisor of M (no pad copy on the input, no slice copy on the output),
      * a multiple of 16 (bf16 packs 16 rows per sublane tile),
      * large enough to amortize the ~0.35us per-grid-step overhead, small
        enough that the grid keeps >= ~8 steps for megacore / pipelining when
        M is large and the double-buffered working set fits the VMEM budget.

    Returns (tm, needs_pad).
    """
    def fits(t):
        # 2x double-buffered bf16 patches + 2x output tile
        # + 2x bf16 weight (default double-buffered, constant index) + bias.
        return (2 * t * K * 2 + 2 * t * N * out_itemsize
                + 2 * K * N * 2 + 2 * N * 4) <= _VMEM_TILE_BUDGET

    # Tiny problems: single grid step, no padding.
    if M % 16 == 0 and M <= 512 and fits(M):
        return M, False

    cap = min(2048, max(16, _round_down(max(M // 8, 16), 16)))
    for t in range(cap, 15, -16):
        if M % t == 0 and fits(t):
            return t, False

    # Fallback for shapes with no usable divisor: pad M up to a multiple of tm.
    t = cap
    while t > 16 and not fits(t):
        t = max(16, _round_down(t // 2, 16))
    return t, True


def _pallas_matmul_bias(patches, w_flat, bias, *, tm, out_dtype):
    # patches: (M, K) bf16 with M % tm == 0
    # w_flat : (K, N) bf16
    # bias   : (1, N) f32
    M, K = patches.shape
    _, N = w_flat.shape
    grid_m = M // tm
    out_bytes = M * N * jnp.dtype(out_dtype).itemsize
    cost = pl.CostEstimate(
        flops=2 * M * K * N,
        transcendentals=0,
        bytes_accessed=(patches.size * patches.dtype.itemsize
                        + w_flat.size * w_flat.dtype.itemsize
                        + bias.size * bias.dtype.itemsize
                        + out_bytes),
    )
    return pl.pallas_call(
        _matmul_bias_kernel,
        out_shape=jax.ShapeDtypeStruct((M, N), out_dtype),
        grid_spec=pltpu.PrefetchScalarGridSpec(
            num_scalar_prefetch=0,
            grid=(grid_m,),
            in_specs=[
                pl.BlockSpec((tm, K), lambda i: (i, 0)),   # streamed M tiles
                pl.BlockSpec((K, N), lambda i: (0, 0)),    # weight, resident
                pl.BlockSpec((1, N), lambda i: (0, 0)),    # bias, resident
            ],
            out_specs=pl.BlockSpec((tm, N), lambda i: (i, 0)),
        ),
        compiler_params=pltpu.CompilerParams(
            # Single independent M axis: shardable across the 2 TCs on v7x.
            dimension_semantics=("parallel",),
            vmem_limit_bytes=_VMEM_LIMIT_BYTES,
        ),
        cost_estimate=cost,
    )(patches, w_flat, bias)


# ----------------------------- PatchEmbed ----------------------------------
class PatchEmbed:
    """2-D PatchEmbed: Conv2d(dim_in, dim_out, kernel, stride, padding), then
    flatten spatial dims and move channels last -> (B, L, dim_out)."""

    def __init__(self, dim_in, dim_out, kernel, stride, padding, key,
                 out_dtype=jnp.bfloat16):
        assert len(kernel) == 2, "This Pallas port implements the 2-D case."
        # TODO(synk): 1-D / 3-D conv_nd variants of the PyTorch module.
        self.dim_in = dim_in
        self.dim_out = dim_out
        self.kernel = tuple(kernel)
        self.stride = tuple(stride)
        self.padding = tuple(padding)
        self.out_dtype = out_dtype
        kh, kw = self.kernel
        kw_key, b_key = jax.random.split(key)
        fan_in = dim_in * kh * kw
        bound = 1.0 / jnp.sqrt(fan_in)
        # PyTorch Conv2d weight layout: (C_out, C_in, kh, kw), f32 master copy.
        self.weight = jax.random.uniform(
            kw_key, (dim_out, dim_in, kh, kw), jnp.float32, -bound, bound)
        self.bias = jax.random.uniform(
            b_key, (dim_out,), jnp.float32, -bound, bound)

        # Pre-flattened / pre-cast kernel operands (done once at setup).
        # K kept exact (no HBM padding); blocks use full-extent K / N.
        K = dim_in * kh * kw
        self._K = K
        w_flat = self.weight.reshape(dim_out, K).T            # (K, N), C-major K
        self._w_flat_bf16 = w_flat.astype(jnp.bfloat16)       # (K, N) bf16
        self._bias_row = self.bias.reshape(1, dim_out).astype(jnp.float32)

    def _im2col(self, x):
        # x: (B, C, H, W) NCHW -> bf16 patches (B*H_out*W_out, C*kh*kw)
        B, C, H, W = x.shape
        kh, kw = self.kernel
        sh, sw = self.stride
        ph, pw = self.padding
        H_out = (H + 2 * ph - kh) // sh + 1
        W_out = (W + 2 * pw - kw) // sw + 1
        # Cast the (small) input once; everything downstream is bf16.
        x_nhwc = x.astype(jnp.bfloat16).transpose(0, 2, 3, 1)          # (B,H,W,C)
        x_pad = jnp.pad(x_nhwc, ((0, 0), (ph, ph), (pw, pw), (0, 0)))
        # Collect kernel taps directly in the final layout; flattening
        # (C, kh*kw) with C most-significant matches PyTorch's OIHW reshape.
        taps = []
        for i in range(kh):
            for j in range(kw):
                taps.append(
                    jax.lax.slice(
                        x_pad,
                        (0, i, j, 0),
                        (B, i + sh * (H_out - 1) + 1, j + sw * (W_out - 1) + 1, C),
                        (1, sh, sw, 1),
                    )
                )  # (B, H_out, W_out, C)
        patches = jnp.stack(taps, axis=-1)            # (B, H_out, W_out, C, kh*kw)
        patches = patches.reshape(B * H_out * W_out, C * kh * kw)
        return patches, H_out, W_out

    def __call__(self, x, mask=None):
        # Mask (if given) must already be at the input spatial resolution.
        # TODO(synk): nearest-neighbor mask resize for coarse masks (do_masked_conv).
        if mask is not None:
            x = x * mask.astype(x.dtype)
        B = x.shape[0]
        patches, H_out, W_out = self._im2col(x)        # (M, K) bf16
        M, K = patches.shape
        tm, needs_pad = _choose_tile_m(
            M, K, self.dim_out, jnp.dtype(self.out_dtype).itemsize)
        if needs_pad:                                  # rare fallback path
            M_pad = _round_up(M, tm)
            patches = jnp.pad(patches, ((0, M_pad - M), (0, 0)))
        out = _pallas_matmul_bias(
            patches, self._w_flat_bf16, self._bias_row,
            tm=tm, out_dtype=self.out_dtype)           # (M[_pad], dim_out)
        if needs_pad:
            out = out[:M]
        # (B, H_out*W_out, C_out) == reshape(B, C_out, -1).transpose(2, 1)
        return out.reshape(B, H_out * W_out, self.dim_out)


# ----------------------------- reference check ------------------------------
def _reference(x, weight, bias, stride, padding):
    y = jax.lax.conv_general_dilated(
        x, weight,
        window_strides=stride,
        padding=[(padding[0], padding[0]), (padding[1], padding[1])],
        dimension_numbers=("NCHW", "OIHW", "NCHW"),
    ) + bias[None, :, None, None]
    B, C, H, W = y.shape
    return y.reshape(B, C, H * W).transpose(0, 2, 1)


if __name__ == "__main__":
    key = jax.random.PRNGKey(0)
    k_param, k_x = jax.random.split(key)

    B, C_in, H, W = 2, 4, 16, 16
    dim_out = 32
    kernel, stride, padding = (7, 7), (4, 4), (3, 3)

    pe = PatchEmbed(C_in, dim_out, kernel, stride, padding, k_param)
    x = jax.random.normal(k_x, (B, C_in, H, W), jnp.float32)

    out = pe(x)                     # (2, 16, 32) bf16
    out = jax.block_until_ready(out)

    ref = _reference(x, pe.weight, pe.bias, stride, padding)
    assert out.shape == ref.shape, (out.shape, ref.shape)
    # bf16 inputs / bf16 output with f32 accumulation vs f32 reference.
    assert jnp.allclose(out.astype(jnp.float32), ref, atol=2e-2, rtol=2e-2), \
        "mismatch vs reference"

    print("KERNEL_OK")
</pallas_src>

<mosaic_0001>
module attributes {stable_mosaic.version = 11 : i64} {
  func.func @_matmul_bias_kernel(%arg0: i32, %arg1: memref<32x196xbf16, #tpu.memory_space<vmem>>, %arg2: memref<196x32xbf16, #tpu.memory_space<vmem>>, %arg3: memref<1x32xf32, #tpu.memory_space<vmem>>, %arg4: memref<32x32xbf16, #tpu.memory_space<vmem>>) attributes {dimension_semantics = [#tpu.dimension_semantics<parallel>], iteration_bounds = array<i64: 1>, scalar_prefetch = 0 : i64, scratch_operands = 0 : i64, tpu.core_type = #tpu.core_type<tc>, window_params = [{transform_indices = @transform_0, window_bounds = array<i64: 32, 196>}, {pipeline_mode = #tpu.pipeline_mode<synchronous>, transform_indices = @transform_1, window_bounds = array<i64: 196, 32>}, {pipeline_mode = #tpu.pipeline_mode<synchronous>, transform_indices = @transform_2, window_bounds = array<i64: 1, 32>}, {transform_indices = @transform_3, window_bounds = array<i64: 32, 32>}]} {
    %c0 = arith.constant 0 : index
    %c0_0 = arith.constant 0 : index
    %0 = vector.load %arg1[%c0, %c0_0] : memref<32x196xbf16, #tpu.memory_space<vmem>>, vector<32x196xbf16>
    %c0_1 = arith.constant 0 : index
    %c0_2 = arith.constant 0 : index
    %1 = vector.load %arg2[%c0_1, %c0_2] : memref<196x32xbf16, #tpu.memory_space<vmem>>, vector<196x32xbf16>
    %cst = arith.constant dense<0.000000e+00> : vector<32x32xf32>
    %2 = tpu.matmul %0, %1, %cst {dimension_numbers = #tpu.dot_dimension_numbers<[1], [0], [0], [1], [0, 0, 1, 1], [], []>} : vector<32x196xbf16>, vector<196x32xbf16>, vector<32x32xf32> -> vector<32x32xf32>
    %c0_3 = arith.constant 0 : index
    %c0_4 = arith.constant 0 : index
    %3 = vector.load %arg3[%c0_3, %c0_4] : memref<1x32xf32, #tpu.memory_space<vmem>>, vector<1x32xf32>
    %4 = vector.broadcast %3 : vector<1x32xf32> to vector<32x32xf32>
    %5 = arith.addf %2, %4 : vector<32x32xf32>
    %6 = arith.truncf %5 : vector<32x32xf32> to vector<32x32xbf16>
    %c0_5 = arith.constant 0 : index
    %c0_6 = arith.constant 0 : index
    %7 = vector.load %arg4[%c0_5, %c0_6] : memref<32x32xbf16, #tpu.memory_space<vmem>>, vector<32x32xbf16>
    tpu.vector_store %arg4[%c0_5, %c0_6], %6 {strides = array<i32>} : memref<32x32xbf16, #tpu.memory_space<vmem>>, vector<32x32xbf16>,
    return
  }
  func.func @transform_0(%arg0: i32) -> (i32, i32) {
    %c0_i32 = arith.constant 0 : i32
    %c0_i32_0 = arith.constant 0 : i32
    return %arg0, %c0_i32 : i32, i32
  }
  func.func @transform_1(%arg0: i32) -> (i32, i32) {
    %c0_i32 = arith.constant 0 : i32
    %c0_i32_0 = arith.constant 0 : i32
    %c0_i32_1 = arith.constant 0 : i32
    return %c0_i32, %c0_i32_0 : i32, i32
  }
  func.func @transform_2(%arg0: i32) -> (i32, i32) {
    %c0_i32 = arith.constant 0 : i32
    %c0_i32_0 = arith.constant 0 : i32
    %c0_i32_1 = arith.constant 0 : i32
    return %c0_i32, %c0_i32_0 : i32, i32
  }
  func.func @transform_3(%arg0: i32) -> (i32, i32) {
    %c0_i32 = arith.constant 0 : i32
    %c0_i32_0 = arith.constant 0 : i32
    return %arg0, %c0_i32 : i32, i32
  }
}

</mosaic_0001>

<llo_original>
// kernel: tpu_custom_call.1
$region0: #{tpu_custom_call.1}
  #allocation0 [shape = 'u32[]', space=smem, size = 0x4, offset = 0x4, fixed_abs, tag = 'smem constant byte address 0x4 - core index']
  #allocation1 [shape = 'u32[144,128]{1,0:T(1,128)}', space=vmem, size = 0x12000, scoped, tag = 'internal scratch']
  %s0 = inlined_call_operand.vmem [shape: bf16[32,196], index: 0, kind: input, shape index: {}]
  %s1 = inlined_call_operand.vmem [shape: bf16[196,32], index: 1, kind: input, shape index: {}]
  %s2 = inlined_call_operand.vmem [shape: f32[1,32], index: 2, kind: input, shape index: {}]
  %s3 = inlined_call_operand.hbm [shape: bf16[32,32], index: 3, kind: output, shape index: {}]
  %s4 = sld [smem:[#allocation0]]
  $region22: #{tpu_custom_call.1} parent=0
    _
  %s6 = ssub.s32 1, %s4
  %s7 = scalar_select 0, %s6, %s4
  $region1: #{tpu_custom_call.1} parent=0
    #allocation2 [shape = 'u8[8192]{0}', space=vmem, size = 0x2000, scoped, tag = 'output window, operand 0, single buffered']
    #allocation3 [shape = 's32[1]{0}', space=sflag, size = 0x4, scoped, tag = 'scoped memory for tpu_custom_call.1']
    %8 = vsyncpa [#allocation3], 0
    // Predicated region
    $region2: #{tpu_custom_call.1} parent=1 // pred_check
      _
    $region3: #{tpu_custom_call.1} parent=1 // pred_check_branch
      %10 = sbr.rel (0) target = $region5
    $region4: #{tpu_custom_call.1} parent=1 // pred_region
      _
    $region5: #{tpu_custom_call.1} parent=1 // pred_fallthru
      _
    // Predicated region
    $region6: #{tpu_custom_call.1} parent=1 // pred_check
      _
    $region7: #{tpu_custom_call.1} parent=1 // pred_check_branch
      %12 = sbr.rel (0) target = $region9
    $region8: #{tpu_custom_call.1} parent=1 // pred_region
      _
    $region9: #{tpu_custom_call.1} parent=1 // pred_fallthru
      _
    // Predicated region
    $region10: #{tpu_custom_call.1} parent=1 // pred_check
      _
    $region11: #{tpu_custom_call.1} parent=1 // pred_check_branch
      %14 = sbr.rel (0) target = $region13
    $region12: #{tpu_custom_call.1} parent=1 // pred_region
      _
    $region13: #{tpu_custom_call.1} parent=1 // pred_fallthru
      _
    %v16 = vld [vmem:[%s0] sm:$0xff]
    %v17 = vld [vmem:[%s0 + $0x8] sm:$0xff]
    %v18 = vld [vmem:[%s0 + $0x10] sm:$0xff]
    %v19 = vld [vmem:[%s0 + $0x18] sm:$0xff]
    %v20 = vld [vmem:[%s1] sm:$0xf]
    %v21 = vld [vmem:[%s1 + $0x4] sm:$0xf]
    %v22 = vld [vmem:[%s1 + $0x8] sm:$0xf]
    %v23 = vld [vmem:[%s1 + $0xc] sm:$0xf]
    %v24 = vld [vmem:[%s1 + $0x10] sm:$0xf]
    %v25 = vld [vmem:[%s1 + $0x14] sm:$0xf]
    %v26 = vld [vmem:[%s1 + $0x18] sm:$0xf]
    %v27 = vld [vmem:[%s1 + $0x1c] sm:$0xf]
    %v28 = vld [vmem:[%s1 + $0x20] sm:$0xf]
    %v29 = vld [vmem:[%s1 + $0x24] sm:$0xf]
    %v30 = vld [vmem:[%s1 + $0x28] sm:$0xf]
    %v31 = vld [vmem:[%s1 + $0x2c] sm:$0xf]
    %v32 = vld [vmem:[%s1 + $0x30] sm:$0xf]
    %v33 = vld [vmem:[%s1 + $0x34] sm:$0xf]
    %v34 = vld [vmem:[%s1 + $0x38] sm:$0xf]
    %v35 = vld [vmem:[%s1 + $0x3c] sm:$0xf]
    %v36 = vld [vmem:[%s1 + $0x40] sm:$0xf]
    %v37 = vld [vmem:[%s1 + $0x44] sm:$0xf]
    %v38 = vld [vmem:[%s1 + $0x48] sm:$0xf]
    %v39 = vld [vmem:[%s1 + $0x4c] sm:$0xf]
    %v40 = vld [vmem:[%s1 + $0x50] sm:$0xf]
    %v41 = vld [vmem:[%s1 + $0x54] sm:$0xf]
    %v42 = vld [vmem:[%s1 + $0x58] sm:$0xf]
    %v43 = vld [vmem:[%s1 + $0x5c] sm:$0xf]
    %v44 = vld [vmem:[%s1 + $0x60] sm:$0x3]
    %v45 = vld [vmem:[%s2] sm:$0x1]
    %v47 = vlaneseq
    %v48 = vshrl.u32 %v47, 7
    %v49 = vsub.s32 0, %v48
    %v50 = vrot.slane %v45, %v49
    %v56 = vunpack.c.l.b16 %v16
    %v57 = vunpack.c.h.b16 %v16
    %v58 = vunpack.c.l.b16 %v17
    %v59 = vunpack.c.h.b16 %v17
    %v60 = vunpack.c.l.b16 %v18
    %v61 = vunpack.c.h.b16 %v18
    %v62 = vunpack.c.l.b16 %v19
    %v63 = vunpack.c.h.b16 %v19
    %v64 = vpack.c.b16 %v58, %v56
    %v65 = vpack.c.b16 %v59, %v57
    %v66 = vpack.c.b16 %v62, %v60
    %v67 = vpack.c.b16 %v63, %v61
    %v95 = vunpack.c.l.b16 %v20
    %v96 = vunpack.c.l.b16 %v21
    %v97 = vunpack.c.l.b16 %v22
    %v98 = vunpack.c.l.b16 %v23
    %v99 = vunpack.c.l.b16 %v24
    %v100 = vunpack.c.l.b16 %v25
    %v101 = vunpack.c.l.b16 %v26
    %v102 = vunpack.c.l.b16 %v27
    %v103 = vunpack.c.l.b16 %v28
    %v104 = vunpack.c.l.b16 %v29
    %v105 = vunpack.c.l.b16 %v30
    %v106 = vunpack.c.l.b16 %v31
    %v107 = vunpack.c.l.b16 %v32
    %v108 = vunpack.c.l.b16 %v33
    %v109 = vunpack.c.l.b16 %v34
    %v110 = vunpack.c.l.b16 %v35
    %v111 = vunpack.c.l.b16 %v36
    %v112 = vunpack.c.l.b16 %v37
    %v113 = vunpack.c.l.b16 %v38
    %v114 = vunpack.c.l.b16 %v39
    %v115 = vunpack.c.l.b16 %v40
    %v116 = vunpack.c.l.b16 %v41
    %v117 = vunpack.c.l.b16 %v42
    %v118 = vunpack.c.l.b16 %v43
    %v119 = vunpack.c.l.b16 %v44
    %v120 = vpack.c.b16 %v96, %v95
    %v121 = vpack.c.b16 %v98, %v97
    %v122 = vpack.c.b16 %v100, %v99
    %v123 = vpack.c.b16 %v102, %v101
    %v124 = vpack.c.b16 %v104, %v103
    %v125 = vpack.c.b16 %v106, %v105
    %v126 = vpack.c.b16 %v108, %v107
    %v127 = vpack.c.b16 %v110, %v109
    %v128 = vpack.c.b16 %v112, %v111
    %v129 = vpack.c.b16 %v114, %v113
    %v130 = vpack.c.b16 %v116, %v115
    %v131 = vpack.c.b16 %v118, %v117
    %v132 = vpack.c.b16 %v119, %v119
    %vm145 = vcmask 556032
    %v147 = vsel %vm145, %v65, 0
    %v150 = vsel %vm145, %v67, 0
    %vm152 = vcmask 1041408
    %v154 = vsel %vm152, %v132, 0
    %156 = vmatprep.subr.bf16.mxu0 0
    %157 = vmatpush1.bf16.msra.mxu0 %v120
    %158 = vmatprep.subr.bf16.mxu0 0
    %159 = vmatpush1.bf16.msra.mxu0 %v121
    %160 = vmatprep.subr.bf16.mxu0 0
    %161 = vmatpush1.bf16.msra.mxu0 %v122
    %162 = vmatprep.subr.bf16.mxu0 0
    %163 = vmatpush1.bf16.msra.mxu0 %v123
    %164 = vmatprep.subr.bf16.mxu0 0
    %165 = vmatpush1.bf16.msra.mxu0 %v124
    %166 = vmatprep.subr.bf16.mxu0 0
    %167 = vmatpush1.bf16.msra.mxu0 %v125
    %168 = vmatprep.subr.bf16.mxu0 0
    %169 = vmatpush1.bf16.msra.mxu0 %v126
    %170 = vmatprep.subr.bf16.mxu0 0
    %171 = vmatpush1.bf16.msra.mxu0 %v127
    %172 = vmatprep.subr.bf16.mxu0 0
    %173 = vmatpush1.bf16.msra.mxu0 %v128
    %174 = vmatprep.subr.bf16.mxu0 0
    %175 = vmatpush1.bf16.msra.mxu0 %v129
    %176 = vmatprep.subr.bf16.mxu0 0
    %177 = vmatpush1.bf16.msra.mxu0 %v130
    %178 = vmatprep.subr.bf16.mxu0 0
    %179 = vmatpush1.bf16.msra.mxu0 %v131
    %180 = vmatprep.subr.bf16.mxu0 0
    %181 = vmatpush1.bf16.msra.mxu0 %v154
    %182 = vmatprep.subr.bf16.mxu0 0
    %183 = vmatpush1.bf16.msra.mxu0 0
    %184 = vmatprep.subr.bf16.mxu0 0
    %185 = vmatpush1.bf16.msra.mxu0 0
    %186 = vmatprep.subr.bf16.mxu0 0
    %187 = vmatpush1.bf16.msra.mxu0 0
    %188 = vmatprep.mubr.bf16.mxu0 %v147
    %189 = vmatmul.mubr.bf16.gmra.mrb[0].mxu0 %v64
    %v190 = vpop.f32.mrb[0].mxu0
    %v191 = vadd.f32 %v50, %v190
    %v192 = vpop.f32.mrb[0].mxu0
    %v193 = vpop.f32.mrb[0].mxu0
    %v194 = vadd.f32 %v50, %v193
    %v195 = vpop.f32.mrb[0].mxu0
    %196 = vmatprep.mubr.bf16.mxu0 %v150
    %197 = vmatmul.mubr.bf16.gmra.mrb[0].mxu0 %v66
    %v198 = vpop.f32.mrb[0].mxu0
    %v199 = vadd.f32 %v50, %v198
    %v200 = vpop.f32.mrb[0].mxu0
    %v201 = vpop.f32.mrb[0].mxu0
    %v202 = vadd.f32 %v50, %v201
    %v203 = vpop.f32.mrb[0].mxu0
    %204 = vdwg.mxu0
    %v205 = vpack.c.bf16 %v194, %v191
    %v206 = vpack.c.bf16 %v202, %v199
    %v209 = vunpack.c.l.b16 %v205
    %v210 = vunpack.c.h.b16 %v205
    %v211 = vunpack.c.l.b16 %v206
    %v212 = vunpack.c.h.b16 %v206
    %v213 = vpack.c.b16 %v209, %v209
    %v214 = vpack.c.b16 %v210, %v210
    %v215 = vpack.c.b16 %v211, %v211
    %v216 = vpack.c.b16 %v212, %v212
    %vm221 = vcmask 257024
    %222 = vst.msk [vmem:[#allocation2] sm:$0xf] %vm221, %v213
    %223 = vst.msk [vmem:[#allocation2 + $0x4] sm:$0xf] %vm221, %v214
    %224 = vst.msk [vmem:[#allocation2 + $0x8] sm:$0xf] %vm221, %v215
    %225 = vst.msk [vmem:[#allocation2 + $0xc] sm:$0xf] %vm221, %v216
    // Predicated region
    $region14: #{tpu_custom_call.1} parent=1 // pred_check
      _
    $region15: #{tpu_custom_call.1} parent=1 // pred_check_branch
      %227 = sbr.rel (0) target = $region17
    $region16: #{tpu_custom_call.1} parent=1 // pred_region
      %s229 = ssub.s32 256, 256
      %230 = vsyncadd [#allocation3], %s229
      %s231 = sshll.u32 [#allocation2], 4
      %s232 = int_to_ptr.vmem [resolvable:$true] %s231
      %237 = dma.vmem_to_hbm [thread:$0]  %s232, 256, %s3, [#allocation3], 64, 64, 4
    $region17: #{tpu_custom_call.1} parent=1 // pred_fallthru
      _
    // Predicated region
    $region18: #{tpu_custom_call.1} parent=1 // pred_check
      _
    $region19: #{tpu_custom_call.1} parent=1 // pred_check_branch
      %239 = sbr.rel (0) target = $region21
    $region20: #{tpu_custom_call.1} parent=1 // pred_region
      %240 = dma.done [#allocation3], 256
    $region21: #{tpu_custom_call.1} parent=1 // pred_fallthru
      _
    %241 = vsyncpa [#allocation3], 1

</llo_original>
